<compile_context>
chip_gen: v6e
topology: v6e:2x2x1
jax: 0.10.0
libtpu: 0.0.40
codegen_flags: <defaults>
</compile_context>

<pallas_src>
import functools

import jax
import jax.numpy as jnp
from jax.experimental import pallas as pl
from jax.experimental.pallas import tpu as pltpu


def _round_up(x, m):
    return ((x + m - 1) // m) * m


# --------------------------------------------------------------------------
# Kernel
# --------------------------------------------------------------------------
def _actor_critic_fused_kernel(
    x_ref,            # [TB, obs]        compute dtype
    w1_ref, b1_ref,   # [obs, 128], [1, 128]
    w2_ref, b2_ref,   # [128, 128], [1, 128]
    w3_ref, b3_ref,   # [128, OUT3], [1, OUT3]
    out_ref,          # [TB, OUT]  f32 slab:
                      #   [0,A)=probs  [A,2A)=log_softmax  2A=value  2A+1=entropy
    *,
    action_dim,
):
    x = x_ref[...]
    w2 = w2_ref[...]
    dt = w2.dtype  # matmul input dtype (f32 or bf16)
    A = action_dim

    # ---- fused actor|critic MLP (128-wide hidden = 64 actor + 64 critic) ----
    # f32 accumulation on the MXU; pre-activation cast to compute dtype BEFORE
    # tanh (bf16 EUP path on v6e/v7x when compute_dtype=bf16).
    h1 = jnp.tanh(
        (jnp.dot(x, w1_ref[...], preferred_element_type=jnp.float32)
         + b1_ref[...]).astype(dt))
    h2 = jnp.tanh(
        (jnp.dot(h1, w2, preferred_element_type=jnp.float32)
         + b2_ref[...]).astype(dt))
    y3 = (jnp.dot(h2, w3_ref[...], preferred_element_type=jnp.float32)
          + b3_ref[...].astype(jnp.float32))

    logits = y3[:, :A]            # actor head
    value = y3[:, A:A + 1]        # critic head

    # ---- exact, numerically stable softmax / log-softmax over actions ----
    m = jnp.max(logits, axis=-1, keepdims=True)
    z = logits - m
    e = jnp.exp(z)
    s = jnp.sum(e, axis=-1, keepdims=True)
    probs = e / s
    logp = z - jnp.log(s)
    entropy = -jnp.sum(probs * logp, axis=-1, keepdims=True)

    # ---- single lane-dense output slab (one full-width HBM stream) ----
    out_ref[...] = jnp.zeros_like(out_ref)
    out_ref[:, 0:A] = probs
    out_ref[:, A:2 * A] = logp
    out_ref[:, 2 * A:2 * A + 1] = value
    out_ref[:, 2 * A + 1:2 * A + 2] = entropy


# --------------------------------------------------------------------------
# Parameter construction / packing
# --------------------------------------------------------------------------
def make_params(key, obs_dim, action_dim, hidden=64, dtype=jnp.float32):
    """Synthetic parameters (PyTorch-like uniform fan-in init).

    Weights are [in_features, out_features] (transposed vs PyTorch) so the
    kernel computes y = x @ W + b.
    """
    def linear(k, fan_in, fan_out):
        kw, kb = jax.random.split(k)
        bound = 1.0 / jnp.sqrt(jnp.asarray(fan_in, dtype))
        w = jax.random.uniform(kw, (fan_in, fan_out), dtype, -bound, bound)
        b = jax.random.uniform(kb, (1, fan_out), dtype, -bound, bound)
        return w, b

    keys = jax.random.split(key, 6)
    w1a, b1a = linear(keys[0], obs_dim, hidden)
    w2a, b2a = linear(keys[1], hidden, hidden)
    w3a, b3a = linear(keys[2], hidden, action_dim)
    w1c, b1c = linear(keys[3], obs_dim, hidden)
    w2c, b2c = linear(keys[4], hidden, hidden)
    w3c, b3c = linear(keys[5], hidden, 1)
    return (w1a, b1a, w2a, b2a, w3a, b3a, w1c, b1c, w2c, b2c, w3c, b3c)


def pack_params(params, action_dim, compute_dtype=jnp.float32):
    """Fuse actor+critic weights into three 128-wide matmuls (done once).

    On v6e/v7x pass compute_dtype=jnp.bfloat16 to halve HBM/VMEM traffic
    (the kernel still accumulates matmuls in f32).  On v5e keep f32.
    """
    (w1a, b1a, w2a, b2a, w3a, b3a, w1c, b1c, w2c, b2c, w3c, b3c) = params
    H = w1a.shape[1]
    A = action_dim
    out3 = _round_up(A + 1, 128)

    w1 = jnp.concatenate([w1a, w1c], axis=1)                      # [obs, 2H]
    b1 = jnp.concatenate([b1a, b1c], axis=1)                      # [1, 2H]
    w2 = jnp.zeros((2 * H, 2 * H), w2a.dtype)
    w2 = w2.at[:H, :H].set(w2a).at[H:, H:].set(w2c)               # block-diag
    b2 = jnp.concatenate([b2a, b2c], axis=1)
    w3 = jnp.zeros((2 * H, out3), w3a.dtype)
    w3 = w3.at[:H, :A].set(w3a).at[H:, A:A + 1].set(w3c)
    b3 = jnp.zeros((1, out3), b3a.dtype)
    b3 = b3.at[:, :A].set(b3a).at[:, A:A + 1].set(b3c)
    return tuple(p.astype(compute_dtype) for p in (w1, b1, w2, b2, w3, b3))


# --------------------------------------------------------------------------
# Pallas forward + module-level wrappers
# --------------------------------------------------------------------------
@functools.partial(jax.jit, static_argnames=("action_dim", "block_rows"))
def forward(state, packed_params, *, action_dim, block_rows=4096):
    """Fused actor+critic forward.  Returns (probs, logp, value, entropy)."""
    B, obs = state.shape
    A = action_dim
    OUT = _round_up(2 * A + 2, 128)

    w1, b1, w2, b2, w3, b3 = packed_params
    x = state.astype(w1.dtype)

    # Tile size: fill the VMEM budget, but guarantee >= 2 grid steps whenever
    # B >= 16 so the parallel batch axis shards across both v7x TensorCores.
    half = -(-B // 2)
    TB = min(block_rows, _round_up(max(half, 8), 8))
    Bp = _round_up(B, TB)
    if Bp != B:
        x = jnp.pad(x, ((0, Bp - B), (0, 0)))

    grid = (Bp // TB,)
    const = lambda shp: pl.BlockSpec(shp, lambda i: (0, 0))   # VMEM-resident

    slab = pl.pallas_call(
        functools.partial(_actor_critic_fused_kernel, action_dim=A),
        out_shape=jax.ShapeDtypeStruct((Bp, OUT), jnp.float32),
        grid=grid,
        in_specs=[
            pl.BlockSpec((TB, obs), lambda i: (i, 0)),   # state tile
            const(w1.shape), const(b1.shape),
            const(w2.shape), const(b2.shape),
            const(w3.shape), const(b3.shape),
        ],
        out_specs=pl.BlockSpec((TB, OUT), lambda i: (i, 0)),
        compiler_params=pltpu.CompilerParams(
            dimension_semantics=("parallel",)),
    )(x, w1, b1, w2, b2, w3, b3)

    probs = slab[:B, :A]
    logp = slab[:B, A:2 * A]
    value = slab[:B, 2 * A:2 * A + 1]
    entropy = slab[:B, 2 * A + 1]
    return probs, logp, value, entropy


@functools.partial(jax.jit, static_argnames=("action_dim", "block_rows"))
def evaluate(state, action, packed_params, *, action_dim, block_rows=4096):
    """ActorCritic.evaluate(state, action) ->
    (action_logprobs [B], state_values [B,1], dist_entropy [B])."""
    _, logp, value, entropy = forward(state, packed_params,
                                      action_dim=action_dim,
                                      block_rows=block_rows)
    a = action.astype(jnp.int32)
    lp = jnp.take_along_axis(logp, a[:, None], axis=-1)[:, 0]
    return lp, value, entropy


@functools.partial(jax.jit, static_argnames=("action_dim", "block_rows"))
def act(state, packed_params, key, *, action_dim, block_rows=4096):
    """ActorCritic.act(state) for a batch: ONE forward pass; samples and
    gathers log-prob from the exact log-softmax emitted by the kernel."""
    _, logp, _, _ = forward(state, packed_params, action_dim=action_dim,
                            block_rows=block_rows)
    action = jax.random.categorical(key, logp, axis=-1)
    lp = jnp.take_along_axis(logp, action[:, None], axis=-1)[:, 0]
    return action, lp


# --------------------------------------------------------------------------
# Pure-JAX reference (unfused, mirrors the PyTorch module)
# --------------------------------------------------------------------------
def _reference_evaluate(state, action, params, action_dim):
    (w1a, b1a, w2a, b2a, w3a, b3a, w1c, b1c, w2c, b2c, w3c, b3c) = params
    h = jnp.tanh(state @ w1a + b1a)
    h = jnp.tanh(h @ w2a + b2a)
    logits = h @ w3a + b3a
    probs = jax.nn.softmax(logits, axis=-1)
    logp = jax.nn.log_softmax(logits, axis=-1)
    lp = jnp.take_along_axis(logp, action[:, None], axis=-1)[:, 0]
    ent = -jnp.sum(probs * logp, axis=-1)
    c = jnp.tanh(state @ w1c + b1c)
    c = jnp.tanh(c @ w2c + b2c)
    value = c @ w3c + b3c
    return lp, value, ent, probs


if __name__ == "__main__":
    B, OBS_DIM, ACTION_DIM = 8, 16, 8

    key = jax.random.PRNGKey(0)
    k_params, k_state, k_action = jax.random.split(key, 3)

    params = make_params(k_params, OBS_DIM, ACTION_DIM)
    # f32 for tight checks; use compute_dtype=jnp.bfloat16 on v6e/v7x in prod.
    packed = pack_params(params, ACTION_DIM, compute_dtype=jnp.float32)
    state = jax.random.normal(k_state, (B, OBS_DIM), jnp.float32)
    action = jax.random.randint(k_action, (B,), 0, ACTION_DIM, jnp.int32)

    logprob, value, entropy = evaluate(state, action, packed,
                                       action_dim=ACTION_DIM)
    jax.block_until_ready((logprob, value, entropy))

    lp_r, v_r, ent_r, p_r = _reference_evaluate(state, action, params,
                                                ACTION_DIM)
    assert jnp.allclose(logprob, lp_r, atol=1e-4)
    assert jnp.allclose(value, v_r, atol=1e-4)
    assert jnp.allclose(entropy, ent_r, atol=1e-4)

    probs, logp, val2, ent2 = forward(state, packed, action_dim=ACTION_DIM)
    assert jnp.allclose(probs, p_r, atol=1e-4)
    assert jnp.allclose(logp, jnp.log(p_r), atol=1e-4)

    # act(): single forward pass, sampling from kernel-emitted log-softmax.
    a, alp = act(state, packed, jax.random.PRNGKey(1), action_dim=ACTION_DIM)
    jax.block_until_ready((a, alp))
    assert a.shape == (B,) and alp.shape == (B,)
    assert jnp.all((a >= 0) & (a < ACTION_DIM))
    # act() log-probs must match evaluate() exactly (same kernel logp).
    lp_check, _, _ = evaluate(state, a, packed, action_dim=ACTION_DIM)
    assert jnp.allclose(alp, lp_check, atol=1e-6)

    print("KERNEL_OK")
</pallas_src>

<mosaic_0001>
module attributes {stable_mosaic.version = 11 : i64} {
  func.func @_actor_critic_fused_kernel(%arg0: i32, %arg1: memref<8x16xf32, #tpu.memory_space<vmem>>, %arg2: memref<16x128xf32, #tpu.memory_space<vmem>>, %arg3: memref<1x128xf32, #tpu.memory_space<vmem>>, %arg4: memref<128x128xf32, #tpu.memory_space<vmem>>, %arg5: memref<1x128xf32, #tpu.memory_space<vmem>>, %arg6: memref<128x128xf32, #tpu.memory_space<vmem>>, %arg7: memref<1x128xf32, #tpu.memory_space<vmem>>, %arg8: memref<8x128xf32, #tpu.memory_space<vmem>>) attributes {dimension_semantics = [#tpu.dimension_semantics<parallel>], iteration_bounds = array<i64: 1>, scalar_prefetch = 0 : i64, scratch_operands = 0 : i64, tpu.core_type = #tpu.core_type<tc>, window_params = [{transform_indices = @transform_0, window_bounds = array<i64: 8, 16>}, {pipeline_mode = #tpu.pipeline_mode<synchronous>, transform_indices = @transform_1, window_bounds = array<i64: 16, 128>}, {pipeline_mode = #tpu.pipeline_mode<synchronous>, transform_indices = @transform_2, window_bounds = array<i64: 1, 128>}, {pipeline_mode = #tpu.pipeline_mode<synchronous>, transform_indices = @transform_3, window_bounds = array<i64: 128, 128>}, {pipeline_mode = #tpu.pipeline_mode<synchronous>, transform_indices = @transform_4, window_bounds = array<i64: 1, 128>}, {pipeline_mode = #tpu.pipeline_mode<synchronous>, transform_indices = @transform_5, window_bounds = array<i64: 128, 128>}, {pipeline_mode = #tpu.pipeline_mode<synchronous>, transform_indices = @transform_6, window_bounds = array<i64: 1, 128>}, {transform_indices = @transform_7, window_bounds = array<i64: 8, 128>}]} {
    %c0 = arith.constant 0 : index
    %c0_0 = arith.constant 0 : index
    %0 = vector.load %arg1[%c0, %c0_0] : memref<8x16xf32, #tpu.memory_space<vmem>>, vector<8x16xf32>
    %c0_1 = arith.constant 0 : index
    %c0_2 = arith.constant 0 : index
    %1 = vector.load %arg4[%c0_1, %c0_2] : memref<128x128xf32, #tpu.memory_space<vmem>>, vector<128x128xf32>
    %c0_3 = arith.constant 0 : index
    %c0_4 = arith.constant 0 : index
    %2 = vector.load %arg2[%c0_3, %c0_4] : memref<16x128xf32, #tpu.memory_space<vmem>>, vector<16x128xf32>
    %cst = arith.constant dense<0.000000e+00> : vector<8x128xf32>
    %3 = tpu.matmul %0, %2, %cst {dimension_numbers = #tpu.dot_dimension_numbers<[1], [0], [0], [1], [0, 0, 1, 1], [], []>} : vector<8x16xf32>, vector<16x128xf32>, vector<8x128xf32> -> vector<8x128xf32>
    %c0_5 = arith.constant 0 : index
    %c0_6 = arith.constant 0 : index
    %4 = vector.load %arg3[%c0_5, %c0_6] : memref<1x128xf32, #tpu.memory_space<vmem>>, vector<1x128xf32>
    %5 = vector.broadcast %4 : vector<1x128xf32> to vector<8x128xf32>
    %6 = arith.addf %3, %5 : vector<8x128xf32>
    %7 = math.tanh %6 : vector<8x128xf32>
    %cst_7 = arith.constant dense<0.000000e+00> : vector<8x128xf32>
    %8 = tpu.matmul %7, %1, %cst_7 {dimension_numbers = #tpu.dot_dimension_numbers<[1], [0], [0], [1], [0, 0, 1, 1], [], []>} : vector<8x128xf32>, vector<128x128xf32>, vector<8x128xf32> -> vector<8x128xf32>
    %c0_8 = arith.constant 0 : index
    %c0_9 = arith.constant 0 : index
    %9 = vector.load %arg5[%c0_8, %c0_9] : memref<1x128xf32, #tpu.memory_space<vmem>>, vector<1x128xf32>
    %10 = vector.broadcast %9 : vector<1x128xf32> to vector<8x128xf32>
    %11 = arith.addf %8, %10 : vector<8x128xf32>
    %12 = math.tanh %11 : vector<8x128xf32>
    %c0_10 = arith.constant 0 : index
    %c0_11 = arith.constant 0 : index
    %13 = vector.load %arg6[%c0_10, %c0_11] : memref<128x128xf32, #tpu.memory_space<vmem>>, vector<128x128xf32>
    %cst_12 = arith.constant dense<0.000000e+00> : vector<8x128xf32>
    %14 = tpu.matmul %12, %13, %cst_12 {dimension_numbers = #tpu.dot_dimension_numbers<[1], [0], [0], [1], [0, 0, 1, 1], [], []>} : vector<8x128xf32>, vector<128x128xf32>, vector<8x128xf32> -> vector<8x128xf32>
    %c0_13 = arith.constant 0 : index
    %c0_14 = arith.constant 0 : index
    %15 = vector.load %arg7[%c0_13, %c0_14] : memref<1x128xf32, #tpu.memory_space<vmem>>, vector<1x128xf32>
    %16 = vector.broadcast %15 : vector<1x128xf32> to vector<8x128xf32>
    %17 = arith.addf %14, %16 : vector<8x128xf32>
    %18 = vector.extract_strided_slice %17 {offsets = [0, 0], sizes = [8, 8], strides = [1, 1]} : vector<8x128xf32> to vector<8x8xf32>
    %19 = vector.extract_strided_slice %17 {offsets = [0, 8], sizes = [8, 1], strides = [1, 1]} : vector<8x128xf32> to vector<8x1xf32>
    %cst_15 = arith.constant dense<0xFF800000> : vector<8xf32>
    %20 = vector.multi_reduction <maximumf>, %18, %cst_15 [1] : vector<8x8xf32> to vector<8xf32>
    %21 = vector.shape_cast %20 : vector<8xf32> to vector<8x1xf32>
    %22 = vector.broadcast %21 : vector<8x1xf32> to vector<8x8xf32>
    %23 = arith.subf %18, %22 : vector<8x8xf32>
    %24 = math.exp %23 : vector<8x8xf32>
    %cst_16 = arith.constant dense<0.000000e+00> : vector<8xf32>
    %25 = vector.multi_reduction <add>, %24, %cst_16 [1] : vector<8x8xf32> to vector<8xf32>
    %26 = vector.shape_cast %25 : vector<8xf32> to vector<8x1xf32>
    %27 = vector.broadcast %26 : vector<8x1xf32> to vector<8x8xf32>
    %28 = arith.divf %24, %27 : vector<8x8xf32>
    %29 = math.log %26 : vector<8x1xf32>
    %30 = vector.broadcast %29 : vector<8x1xf32> to vector<8x8xf32>
    %31 = arith.subf %23, %30 : vector<8x8xf32>
    %32 = arith.mulf %28, %31 : vector<8x8xf32>
    %cst_17 = arith.constant dense<0.000000e+00> : vector<8xf32>
    %33 = vector.multi_reduction <add>, %32, %cst_17 [1] : vector<8x8xf32> to vector<8xf32>
    %34 = vector.shape_cast %33 : vector<8xf32> to vector<8x1xf32>
    %cst_18 = arith.constant 0.000000e+00 : f32
    %35 = vector.broadcast %cst_18 : f32 to vector<8x1xf32>
    %36 = arith.subf %35, %34 : vector<8x1xf32>
    %cst_19 = arith.constant 0.000000e+00 : f32
    %37 = vector.broadcast %cst_19 : f32 to vector<8x128xf32>
    %c0_20 = arith.constant 0 : index
    %c0_21 = arith.constant 0 : index
    %38 = vector.load %arg8[%c0_20, %c0_21] : memref<8x128xf32, #tpu.memory_space<vmem>>, vector<8x128xf32>
    tpu.vector_store %arg8[%c0_20, %c0_21], %37 {strides = array<i32>} : memref<8x128xf32, #tpu.memory_space<vmem>>, vector<8x128xf32>,
    %c0_22 = arith.constant 0 : index
    %c0_23 = arith.constant 0 : index
    %39 = vector.load %arg8[%c0_22, %c0_23] : memref<8x128xf32, #tpu.memory_space<vmem>>, vector<8x8xf32>
    tpu.vector_store %arg8[%c0_22, %c0_23], %28 {strides = array<i32>} : memref<8x128xf32, #tpu.memory_space<vmem>>, vector<8x8xf32>,
    %c0_24 = arith.constant 0 : index
    %c8 = arith.constant 8 : index
    %40 = vector.load %arg8[%c0_24, %c8] : memref<8x128xf32, #tpu.memory_space<vmem>>, vector<8x8xf32>
    tpu.vector_store %arg8[%c0_24, %c8], %31 {strides = array<i32>} : memref<8x128xf32, #tpu.memory_space<vmem>>, vector<8x8xf32>,
    %c0_25 = arith.constant 0 : index
    %c16 = arith.constant 16 : index
    %41 = vector.load %arg8[%c0_25, %c16] : memref<8x128xf32, #tpu.memory_space<vmem>>, vector<8x1xf32>
    tpu.vector_store %arg8[%c0_25, %c16], %19 {strides = array<i32>} : memref<8x128xf32, #tpu.memory_space<vmem>>, vector<8x1xf32>,
    %c0_26 = arith.constant 0 : index
    %c17 = arith.constant 17 : index
    %42 = vector.load %arg8[%c0_26, %c17] : memref<8x128xf32, #tpu.memory_space<vmem>>, vector<8x1xf32>
    tpu.vector_store %arg8[%c0_26, %c17], %36 {strides = array<i32>} : memref<8x128xf32, #tpu.memory_space<vmem>>, vector<8x1xf32>,
    return
  }
  func.func @transform_0(%arg0: i32) -> (i32, i32) {
    %c0_i32 = arith.constant 0 : i32
    %c0_i32_0 = arith.constant 0 : i32
    return %arg0, %c0_i32 : i32, i32
  }
  func.func @transform_1(%arg0: i32) -> (i32, i32) {
    %c0_i32 = arith.constant 0 : i32
    %c0_i32_0 = arith.constant 0 : i32
    %c0_i32_1 = arith.constant 0 : i32
    return %c0_i32, %c0_i32_0 : i32, i32
  }
  func.func @transform_2(%arg0: i32) -> (i32, i32) {
    %c0_i32 = arith.constant 0 : i32
    %c0_i32_0 = arith.constant 0 : i32
    %c0_i32_1 = arith.constant 0 : i32
    return %c0_i32, %c0_i32_0 : i32, i32
  }
  func.func @transform_3(%arg0: i32) -> (i32, i32) {
    %c0_i32 = arith.constant 0 : i32
    %c0_i32_0 = arith.constant 0 : i32
    %c0_i32_1 = arith.constant 0 : i32
    return %c0_i32, %c0_i32_0 : i32, i32
  }
  func.func @transform_4(%arg0: i32) -> (i32, i32) {
    %c0_i32 = arith.constant 0 : i32
    %c0_i32_0 = arith.constant 0 : i32
    %c0_i32_1 = arith.constant 0 : i32
    return %c0_i32, %c0_i32_0 : i32, i32
  }
  func.func @transform_5(%arg0: i32) -> (i32, i32) {
    %c0_i32 = arith.constant 0 : i32
    %c0_i32_0 = arith.constant 0 : i32
    %c0_i32_1 = arith.constant 0 : i32
    return %c0_i32, %c0_i32_0 : i32, i32
  }
  func.func @transform_6(%arg0: i32) -> (i32, i32) {
    %c0_i32 = arith.constant 0 : i32
    %c0_i32_0 = arith.constant 0 : i32
    %c0_i32_1 = arith.constant 0 : i32
    return %c0_i32, %c0_i32_0 : i32, i32
  }
  func.func @transform_7(%arg0: i32) -> (i32, i32) {
    %c0_i32 = arith.constant 0 : i32
    %c0_i32_0 = arith.constant 0 : i32
    return %arg0, %c0_i32 : i32, i32
  }
}

</mosaic_0001>

<llo_original>
// kernel: forward.1
$region0: #{forward.1}
  #allocation0 [shape = 'u32[]', space=smem, size = 0x4, offset = 0x4, fixed_abs, tag = 'smem constant byte address 0x4 - core index']
  #allocation1 [shape = 'u32[144,128]{1,0:T(1,128)}', space=vmem, size = 0x12000, scoped, tag = 'internal scratch']
  %s0 = inlined_call_operand.hbm [shape: f32[8,16], index: 0, kind: input, shape index: {}]
  %s1 = inlined_call_operand.hbm [shape: f32[16,128], index: 1, kind: input, shape index: {}]
  %s2 = inlined_call_operand.vmem [shape: f32[1,128], index: 2, kind: input, shape index: {}]
  %s3 = inlined_call_operand.hbm [shape: f32[128,128], index: 3, kind: input, shape index: {}]
  %s4 = inlined_call_operand.vmem [shape: f32[1,128], index: 4, kind: input, shape index: {}]
  %s5 = inlined_call_operand.hbm [shape: f32[128,128], index: 5, kind: input, shape index: {}]
  %s6 = inlined_call_operand.vmem [shape: f32[1,128], index: 6, kind: input, shape index: {}]
  %s7 = inlined_call_operand.vmem [shape: f32[8,128], index: 7, kind: output, shape index: {}]
  %s8 = sld [smem:[#allocation0]]
  $region54: #{forward.1} parent=0
    _
  %s10 = ssub.s32 1, %s8
  %s11 = scalar_select 0, %s10, %s8
  $region1: #{forward.1} parent=0
    #allocation2 [shape = 'u8[4096]{0}', space=vmem, size = 0x1000, scoped, tag = 'input window, operand 0, single buffered']
    #allocation3 [shape = 's32[1]{0}', space=sflag, size = 0x4, scoped, tag = 'scoped memory for forward.1']
    #allocation4 [shape = 'u8[8192]{0}', space=vmem, size = 0x2000, scoped, tag = 'input window, operand 1, single buffered']
    #allocation5 [shape = 's32[1]{0}', space=sflag, size = 0x4, scoped, tag = 'scoped memory for forward.1']
    #allocation6 [shape = 'u8[65536]{0}', space=vmem, size = 0x10000, scoped, tag = 'input window, operand 3, single buffered']
    #allocation7 [shape = 'u8[65536]{0}', space=vmem, size = 0x10000, scoped, tag = 'input window, operand 5, single buffered']
    #allocation8 [shape = 's32[1]{0}', space=sflag, size = 0x4, scoped, tag = 'scoped memory for forward.1']
    %12 = vsyncpa [#allocation3], 0
    %13 = vsyncpa [#allocation5], 0
    %14 = vsyncpa [#allocation8], 0
    // Predicated region
    $region2: #{forward.1} parent=1 // pred_check
      _
    $region3: #{forward.1} parent=1 // pred_check_branch
      %16 = sbr.rel (0) target = $region5
    $region4: #{forward.1} parent=1 // pred_region
      %s18 = ssub.s32 128, 128
      %19 = vsyncadd [#allocation3], %s18
      %s21 = sshll.u32 [#allocation2], 4
      %s22 = int_to_ptr.vmem [resolvable:$true] %s21
      %24 = dma.hbm_to_vmem [thread:$0]  %s0, 128, %s22, [#allocation3]
    $region5: #{forward.1} parent=1 // pred_fallthru
      _
    // Predicated region
    $region6: #{forward.1} parent=1 // pred_check
      _
    $region7: #{forward.1} parent=1 // pred_check_branch
      %26 = sbr.rel (0) target = $region9
    $region8: #{forward.1} parent=1 // pred_region
      %s28 = ssub.s32 256, 256
      %29 = vsyncadd [#allocation5], %s28
      %s30 = sshll.u32 [#allocation4], 4
      %s31 = int_to_ptr.vmem [resolvable:$true] %s30
      %36 = dma.hbm_to_vmem [thread:$0]  %s1, 256, %s31, [#allocation5], 128, 128, 8
    $region9: #{forward.1} parent=1 // pred_fallthru
      _
    // Predicated region
    $region10: #{forward.1} parent=1 // pred_check
      _
    $region11: #{forward.1} parent=1 // pred_check_branch
      %38 = sbr.rel (0) target = $region13
    $region12: #{forward.1} parent=1 // pred_region
      _
    $region13: #{forward.1} parent=1 // pred_fallthru
      _
    // Predicated region
    $region14: #{forward.1} parent=1 // pred_check
      _
    $region15: #{forward.1} parent=1 // pred_check_branch
      %40 = sbr.rel (0) target = $region17
    $region16: #{forward.1} parent=1 // pred_region
      %s42 = ssub.s32 2048, 2048
      %43 = vsyncadd [#allocation5], %s42
      %s44 = sshll.u32 [#allocation6], 4
      %s45 = int_to_ptr.vmem [resolvable:$true] %s44
      %50 = dma.hbm_to_vmem [thread:$0]  %s3, 2048, %s45, [#allocation5], 128, 128, 8
    $region17: #{forward.1} parent=1 // pred_fallthru
      _
    // Predicated region
    $region18: #{forward.1} parent=1 // pred_check
      _
    $region19: #{forward.1} parent=1 // pred_check_branch
      %52 = sbr.rel (0) target = $region21
    $region20: #{forward.1} parent=1 // pred_region
      _
    $region21: #{forward.1} parent=1 // pred_fallthru
      _
    // Predicated region
    $region22: #{forward.1} parent=1 // pred_check
      _
    $region23: #{forward.1} parent=1 // pred_check_branch
      %54 = sbr.rel (0) target = $region25
    $region24: #{forward.1} parent=1 // pred_region
      %s56 = ssub.s32 2048, 2048
      %57 = vsyncadd [#allocation8], %s56
      %s58 = sshll.u32 [#allocation7], 4
      %s59 = int_to_ptr.vmem [resolvable:$true] %s58
      %64 = dma.hbm_to_vmem [thread:$0]  %s5, 2048, %s59, [#allocation8], 128, 128, 8
    $region25: #{forward.1} parent=1 // pred_fallthru
      _
    // Predicated region
    $region26: #{forward.1} parent=1 // pred_check
      _
    $region27: #{forward.1} parent=1 // pred_check_branch
      %66 = sbr.rel (0) target = $region29
    $region28: #{forward.1} parent=1 // pred_region
      _
    $region29: #{forward.1} parent=1 // pred_fallthru
      _
    // Predicated region
    $region30: #{forward.1} parent=1 // pred_check
      _
    $region31: #{forward.1} parent=1 // pred_check_branch
      %68 = sbr.rel (0) target = $region33
    $region32: #{forward.1} parent=1 // pred_region
      %69 = dma.done [#allocation3], 128
    $region33: #{forward.1} parent=1 // pred_fallthru
      _
    // Predicated region
    $region34: #{forward.1} parent=1 // pred_check
      _
    $region35: #{forward.1} parent=1 // pred_check_branch
      %71 = sbr.rel (0) target = $region37
    $region36: #{forward.1} parent=1 // pred_region
      %72 = dma.done [#allocation5], 256
    $region37: #{forward.1} parent=1 // pred_fallthru
      _
    // Predicated region
    $region38: #{forward.1} parent=1 // pred_check
      _
    $region39: #{forward.1} parent=1 // pred_check_branch
      %74 = sbr.rel (0) target = $region41
    $region40: #{forward.1} parent=1 // pred_region
      %75 = dma.done [#allocation5], 2048
    $region41: #{forward.1} parent=1 // pred_fallthru
      _
    // Predicated region
    $region42: #{forward.1} parent=1 // pred_check
      _
    $region43: #{forward.1} parent=1 // pred_check_branch
      %77 = sbr.rel (0) target = $region45
    $region44: #{forward.1} parent=1 // pred_region
      %78 = dma.done [#allocation8], 2048
    $region45: #{forward.1} parent=1 // pred_fallthru
      _
    %v79 = vld [vmem:[#allocation2] sm:$0xff]
    %v80 = vld [vmem:[#allocation6] sm:$0xff]
    %v81 = vld [vmem:[#allocation6 + $0x8] sm:$0xff]
    %v82 = vld [vmem:[#allocation6 + $0x10] sm:$0xff]
    %v83 = vld [vmem:[#allocation6 + $0x18] sm:$0xff]
    %v84 = vld [vmem:[#allocation6 + $0x20] sm:$0xff]
    %v85 = vld [vmem:[#allocation6 + $0x28] sm:$0xff]
    %v86 = vld [vmem:[#allocation6 + $0x30] sm:$0xff]
    %v87 = vld [vmem:[#allocation6 + $0x38] sm:$0xff]
    %v88 = vld [vmem:[#allocation6 + $0x40] sm:$0xff]
    %v89 = vld [vmem:[#allocation6 + $0x48] sm:$0xff]
    %v90 = vld [vmem:[#allocation6 + $0x50] sm:$0xff]
    %v91 = vld [vmem:[#allocation6 + $0x58] sm:$0xff]
    %v92 = vld [vmem:[#allocation6 + $0x60] sm:$0xff]
    %v93 = vld [vmem:[#allocation6 + $0x68] sm:$0xff]
    %v94 = vld [vmem:[#allocation6 + $0x70] sm:$0xff]
    %v95 = vld [vmem:[#allocation6 + $0x78] sm:$0xff]
    %v96 = vld [vmem:[#allocation4] sm:$0xff]
    %v97 = vld [vmem:[#allocation4 + $0x8] sm:$0xff]
    %v98 = vld [vmem:[%s2] sm:$0x1]
    %v100 = vlaneseq
    %v101 = vshrl.u32 %v100, 7
    %v102 = vsub.s32 0, %v101
    %v103 = vrot.slane %v98, %v102
    %vm105 = vcmask 130048
    %v107 = vsel %vm105, %v79, 0
    %109 = vmatprep.subr.mxu0 0.0
    %110 = vmatpush1.msra.mxu0 0.0
    %111 = vmatprep.subr.mxu0 0.0
    %112 = vmatpush1.msra.mxu0 0.0
    %113 = vmatprep.subr.mxu0 0.0
    %114 = vmatpush1.msra.mxu0 0.0
    %115 = vmatprep.subr.mxu0 0.0
    %116 = vmatpush1.msra.mxu0 0.0
    %117 = vmatprep.subr.mxu0 0.0
    %118 = vmatpush1.msra.mxu0 0.0
    %119 = vmatprep.subr.mxu0 0.0
    %120 = vmatpush1.msra.mxu0 0.0
    %121 = vmatprep.subr.mxu0 0.0
    %122 = vmatpush1.msra.mxu0 0.0
    %123 = vmatprep.subr.mxu0 0.0
    %124 = vmatpush1.msra.mxu0 0.0
    %125 = vmatprep.subr.mxu0 0.0
    %126 = vmatpush1.msra.mxu0 0.0
    %127 = vmatprep.subr.mxu0 0.0
    %128 = vmatpush1.msra.mxu0 0.0
    %129 = vmatprep.subr.mxu0 0.0
    %130 = vmatpush1.msra.mxu0 0.0
    %131 = vmatprep.subr.mxu0 0.0
    %132 = vmatpush1.msra.mxu0 0.0
    %133 = vmatprep.subr.mxu0 0.0
    %134 = vmatpush1.msra.mxu0 0.0
    %135 = vmatprep.subr.mxu0 0.0
    %136 = vmatpush1.msra.mxu0 0.0
    %137 = vmatprep.subr.mxu0 0.0
    %138 = vmatpush1.msra.mxu0 %v97
    %139 = vmatprep.subr.mxu0 0.0
    %140 = vmatpush1.msra.mxu0 %v96
    %141 = vmatprep.subr.mxu0 0.0
    %142 = vmatpush2.msra.mxu0 0.0
    %143 = vmatprep.subr.mxu0 0.0
    %144 = vmatpush2.msra.mxu0 0.0
    %145 = vmatprep.subr.mxu0 0.0
    %146 = vmatpush2.msra.mxu0 0.0
    %147 = vmatprep.subr.mxu0 0.0
    %148 = vmatpush2.msra.mxu0 0.0
    %149 = vmatprep.subr.mxu0 0.0
    %150 = vmatpush2.msra.mxu0 0.0
    %151 = vmatprep.subr.mxu0 0.0
    %152 = vmatpush2.msra.mxu0 0.0
    %153 = vmatprep.subr.mxu0 0.0
    %154 = vmatpush2.msra.mxu0 0.0
    %155 = vmatprep.subr.mxu0 0.0
    %156 = vmatpush2.msra.mxu0 0.0
    %157 = vmatprep.subr.mxu0 0.0
    %158 = vmatpush2.msra.mxu0 0.0
    %159 = vmatprep.subr.mxu0 0.0
    %160 = vmatpush2.msra.mxu0 0.0
    %161 = vmatprep.subr.mxu0 0.0
    %162 = vmatpush2.msra.mxu0 0.0
    %163 = vmatprep.subr.mxu0 0.0
    %164 = vmatpush2.msra.mxu0 0.0
    %165 = vmatprep.subr.mxu0 0.0
    %166 = vmatpush2.msra.mxu0 0.0
    %167 = vmatprep.subr.mxu0 0.0
    %168 = vmatpush2.msra.mxu0 0.0
    %169 = vmatprep.subr.mxu0 0.0
    %170 = vmatpush2.msra.mxu0 0.0
    %171 = vmatprep.subr.mxu0 0.0
    %172 = vmatpush2.msra.mxu0 0.0
    %173 = vmatprep.mubr.f32.mxu0 0.0
    %174 = vmatmul.mubr.f32.gmra.mxu0 %v107
    %v175 = vpop.f32.mrf.mxu0
    %v176 = vadd.f32 %v103, %v175
    %v177 = vpop.f32.mrf.mxu0
    %178 = vdwg.mxu0
    %v179 = vtanh.pop %v176
    %v180 = vld [vmem:[%s4] sm:$0x1]
    %v182 = vlaneseq
    %v183 = vshrl.u32 %v182, 7
    %v184 = vsub.s32 0, %v183
    %v185 = vrot.slane %v180, %v184
    %187 = vmatprep.subr.mxu0 0.0
    %188 = vmatpush1.msra.mxu0 %v95
    %189 = vmatprep.subr.mxu0 0.0
    %190 = vmatpush1.msra.mxu0 %v94
    %191 = vmatprep.subr.mxu0 0.0
    %192 = vmatpush1.msra.mxu0 %v93
    %193 = vmatprep.subr.mxu0 0.0
    %194 = vmatpush1.msra.mxu0 %v92
    %195 = vmatprep.subr.mxu0 0.0
    %196 = vmatpush1.msra.mxu0 %v91
    %197 = vmatprep.subr.mxu0 0.0
    %198 = vmatpush1.msra.mxu0 %v90
    %199 = vmatprep.subr.mxu0 0.0
    %200 = vmatpush1.msra.mxu0 %v89
    %201 = vmatprep.subr.mxu0 0.0
    %202 = vmatpush1.msra.mxu0 %v88
    %203 = vmatprep.subr.mxu0 0.0
    %204 = vmatpush1.msra.mxu0 %v87
    %205 = vmatprep.subr.mxu0 0.0
    %206 = vmatpush1.msra.mxu0 %v86
    %207 = vmatprep.subr.mxu0 0.0
    %208 = vmatpush1.msra.mxu0 %v85
    %209 = vmatprep.subr.mxu0 0.0
    %210 = vmatpush1.msra.mxu0 %v84
    %211 = vmatprep.subr.mxu0 0.0
    %212 = vmatpush1.msra.mxu0 %v83
    %213 = vmatprep.subr.mxu0 0.0
    %214 = vmatpush1.msra.mxu0 %v82
    %215 = vmatprep.subr.mxu0 0.0
    %216 = vmatpush1.msra.mxu0 %v81
    %217 = vmatprep.subr.mxu0 0.0
    %218 = vmatpush1.msra.mxu0 %v80
    %219 = vmatprep.subr.mxu0 0.0
    %220 = vmatpush2.msra.mxu0 0.0
    %221 = vmatprep.subr.mxu0 0.0
    %222 = vmatpush2.msra.mxu0 0.0
    %223 = vmatprep.subr.mxu0 0.0
    %224 = vmatpush2.msra.mxu0 0.0
    %225 = vmatprep.subr.mxu0 0.0
    %226 = vmatpush2.msra.mxu0 0.0
    %227 = vmatprep.subr.mxu0 0.0
    %228 = vmatpush2.msra.mxu0 0.0
    %229 = vmatprep.subr.mxu0 0.0
    %230 = vmatpush2.msra.mxu0 0.0
    %231 = vmatprep.subr.mxu0 0.0
    %232 = vmatpush2.msra.mxu0 0.0
    %233 = vmatprep.subr.mxu0 0.0
    %234 = vmatpush2.msra.mxu0 0.0
    %235 = vmatprep.subr.mxu0 0.0
    %236 = vmatpush2.msra.mxu0 0.0
    %237 = vmatprep.subr.mxu0 0.0
    %238 = vmatpush2.msra.mxu0 0.0
    %239 = vmatprep.subr.mxu0 0.0
    %240 = vmatpush2.msra.mxu0 0.0
    %241 = vmatprep.subr.mxu0 0.0
    %242 = vmatpush2.msra.mxu0 0.0
    %243 = vmatprep.subr.mxu0 0.0
    %244 = vmatpush2.msra.mxu0 0.0
    %245 = vmatprep.subr.mxu0 0.0
    %246 = vmatpush2.msra.mxu0 0.0
    %247 = vmatprep.subr.mxu0 0.0
    %248 = vmatpush2.msra.mxu0 0.0
    %249 = vmatprep.subr.mxu0 0.0
    %250 = vmatpush2.msra.mxu0 0.0
    %251 = vmatprep.mubr.f32.mxu0 0.0
    %252 = vmatmul.mubr.f32.gmra.mxu0 %v179
    %v253 = vpop.f32.mrf.mxu0
    %v254 = vadd.f32 %v185, %v253
    %v255 = vpop.f32.mrf.mxu0
    %256 = vdwg.mxu0
    %v257 = vtanh.pop %v254
    %v258 = vld [vmem:[#allocation7] sm:$0xff]
    %v259 = vld [vmem:[#allocation7 + $0x8] sm:$0xff]
    %v260 = vld [vmem:[#allocation7 + $0x10] sm:$0xff]
    %v261 = vld [vmem:[#allocation7 + $0x18] sm:$0xff]
    %v262 = vld [vmem:[#allocation7 + $0x20] sm:$0xff]
    %v263 = vld [vmem:[#allocation7 + $0x28] sm:$0xff]
    %v264 = vld [vmem:[#allocation7 + $0x30] sm:$0xff]
    %v265 = vld [vmem:[#allocation7 + $0x38] sm:$0xff]
    %v266 = vld [vmem:[#allocation7 + $0x40] sm:$0xff]
    %v267 = vld [vmem:[#allocation7 + $0x48] sm:$0xff]
    %v268 = vld [vmem:[#allocation7 + $0x50] sm:$0xff]
    %v269 = vld [vmem:[#allocation7 + $0x58] sm:$0xff]
    %v270 = vld [vmem:[#allocation7 + $0x60] sm:$0xff]
    %v271 = vld [vmem:[#allocation7 + $0x68] sm:$0xff]
    %v272 = vld [vmem:[#allocation7 + $0x70] sm:$0xff]
    %v273 = vld [vmem:[#allocation7 + $0x78] sm:$0xff]
    %v274 = vld [vmem:[%s6] sm:$0x1]
    %v276 = vlaneseq
    %v277 = vshrl.u32 %v276, 7
    %v278 = vsub.s32 0, %v277
    %v279 = vrot.slane %v274, %v278
    %281 = vmatprep.subr.mxu0 0.0
    %282 = vmatpush1.msra.mxu0 %v273
    %283 = vmatprep.subr.mxu0 0.0
    %284 = vmatpush1.msra.mxu0 %v272
    %285 = vmatprep.subr.mxu0 0.0
    %286 = vmatpush1.msra.mxu0 %v271
    %287 = vmatprep.subr.mxu0 0.0
    %288 = vmatpush1.msra.mxu0 %v270
    %289 = vmatprep.subr.mxu0 0.0
    %290 = vmatpush1.msra.mxu0 %v269
    %291 = vmatprep.subr.mxu0 0.0
    %292 = vmatpush1.msra.mxu0 %v268
    %293 = vmatprep.subr.mxu0 0.0
    %294 = vmatpush1.msra.mxu0 %v267
    %295 = vmatprep.subr.mxu0 0.0
    %296 = vmatpush1.msra.mxu0 %v266
    %297 = vmatprep.subr.mxu0 0.0
    %298 = vmatpush1.msra.mxu0 %v265
    %299 = vmatprep.subr.mxu0 0.0
    %300 = vmatpush1.msra.mxu0 %v264
    %301 = vmatprep.subr.mxu0 0.0
    %302 = vmatpush1.msra.mxu0 %v263
    %303 = vmatprep.subr.mxu0 0.0
    %304 = vmatpush1.msra.mxu0 %v262
    %305 = vmatprep.subr.mxu0 0.0
    %306 = vmatpush1.msra.mxu0 %v261
    %307 = vmatprep.subr.mxu0 0.0
    %308 = vmatpush1.msra.mxu0 %v260
    %309 = vmatprep.subr.mxu0 0.0
    %310 = vmatpush1.msra.mxu0 %v259
    %311 = vmatprep.subr.mxu0 0.0
    %312 = vmatpush1.msra.mxu0 %v258
    %313 = vmatprep.subr.mxu0 0.0
    %314 = vmatpush2.msra.mxu0 0.0
    %315 = vmatprep.subr.mxu0 0.0
    %316 = vmatpush2.msra.mxu0 0.0
    %317 = vmatprep.subr.mxu0 0.0
    %318 = vmatpush2.msra.mxu0 0.0
    %319 = vmatprep.subr.mxu0 0.0
    %320 = vmatpush2.msra.mxu0 0.0
    %321 = vmatprep.subr.mxu0 0.0
    %322 = vmatpush2.msra.mxu0 0.0
    %323 = vmatprep.subr.mxu0 0.0
    %324 = vmatpush2.msra.mxu0 0.0
    %325 = vmatprep.subr.mxu0 0.0
    %326 = vmatpush2.msra.mxu0 0.0
    %327 = vmatprep.subr.mxu0 0.0
    %328 = vmatpush2.msra.mxu0 0.0
    %329 = vmatprep.subr.mxu0 0.0
    %330 = vmatpush2.msra.mxu0 0.0
    %331 = vmatprep.subr.mxu0 0.0
    %332 = vmatpush2.msra.mxu0 0.0
    %333 = vmatprep.subr.mxu0 0.0
    %334 = vmatpush2.msra.mxu0 0.0
    %335 = vmatprep.subr.mxu0 0.0
    %336 = vmatpush2.msra.mxu0 0.0
    %337 = vmatprep.subr.mxu0 0.0
    %338 = vmatpush2.msra.mxu0 0.0
    %339 = vmatprep.subr.mxu0 0.0
    %340 = vmatpush2.msra.mxu0 0.0
    %341 = vmatprep.subr.mxu0 0.0
    %342 = vmatpush2.msra.mxu0 0.0
    %343 = vmatprep.subr.mxu0 0.0
    %344 = vmatpush2.msra.mxu0 0.0
    %345 = vmatprep.mubr.f32.mxu0 0.0
    %346 = vmatmul.mubr.f32.gmra.mxu0 %v257
    %v347 = vpop.f32.mrf.mxu0
    %v348 = vadd.f32 %v279, %v347
    %v349 = vpop.f32.mrf.mxu0
    %350 = vdwg.mxu0
    %vm351 = vcmask 64512
    %v352 = vsel %vm351, %v348, -inf
    %353 = vmax.xlane.f32.xlu0 %v352
    %v354 = vpop.xlane.xlu0 %353
    %v355 = vsub.f32 %v348, %v354
    %v356 = vmul.f32 %v355, 1.442695
    %v357 = vpow.pop %v356
    %v358 = vsel %vm351, %v357, 0.0
    %359 = vadd.xlane.f32.xlu0 %v358
    %v360 = vpop.xlane.xlu0 %359
    %v361 = vrcp.pop %v360
    %v362 = vmul.f32 %v357, %v361
    %v363 = vlog2.pop %v360
    %v364 = vmul.f32 %v363, 0.6931472
    %v365 = vsub.f32 %v355, %v364
    %v366 = vmul.f32 %v362, %v365
    %v367 = vsel %vm351, %v366, 0.0
    %368 = vadd.xlane.f32.xlu0 %v367
    %v369 = vpop.xlane.xlu0 %368
    %v370 = vsub.f32 0.0, %v369
    %371 = vst [vmem:[%s7] sm:$0xff] 0.0
    %372 = vst.msk [vmem:[%s7] sm:$0xff] %vm351, %v362
    %374 = vrot.lane.b32.xlu0 %v365, 8
    %v375 = vpop.permute.xlu0 %374
    %vm377 = vcmask 130112
    %378 = vst.msk [vmem:[%s7] sm:$0xff] %vm377, %v375
    %380 = vrot.lane.b32.xlu0 %v348, 8
    %v381 = vpop.permute.xlu0 %380
    %vm383 = vcmask 138368
    %384 = vst.msk [vmem:[%s7] sm:$0xff] %vm383, %v381
    %vm385 = vcmask 146568
    %386 = vst.msk [vmem:[%s7] sm:$0xff] %vm385, %v370
    // Predicated region
    $region46: #{forward.1} parent=1 // pred_check
      _
    $region47: #{forward.1} parent=1 // pred_check_branch
      %388 = sbr.rel (0) target = $region49
    $region48: #{forward.1} parent=1 // pred_region
      _
    $region49: #{forward.1} parent=1 // pred_fallthru
      _
    // Predicated region
    $region50: #{forward.1} parent=1 // pred_check
      _
    $region51: #{forward.1} parent=1 // pred_check_branch
      %390 = sbr.rel (0) target = $region53
    $region52: #{forward.1} parent=1 // pred_region
      _
    $region53: #{forward.1} parent=1 // pred_fallthru
      _
    %391 = vsyncpa [#allocation3], 1
    %392 = vsyncpa [#allocation5], 1
    %393 = vsyncpa [#allocation8], 1

</llo_original>
